<compile_context>
chip_gen: v7x
topology: tpu7x:2x2x1
jax: 0.10.0
libtpu: 0.0.40
codegen_flags: <defaults>
</compile_context>

<pallas_src>
import numpy as np
import jax
import jax.numpy as jnp
from jax import lax
from jax.experimental import pallas as pl
from jax.experimental.pallas import tpu as pltpu


def _hpun_kernel(pooled_ref, comb_ref, x_ref, wkron_ref, bias_ref, o_ref):
    # folded (grouped 3x3 conv + bilinear x4 upsample): one MXU matmul
    up = jnp.dot(pooled_ref[...], comb_ref[...], preferred_element_type=jnp.float32)
    # residual add with the original input
    y = up + x_ref[...]
    # pointwise 1x1 conv as block-diagonal kron(w_pw, I_N) matmul + folded biases
    o_ref[...] = (jnp.dot(wkron_ref[...], y, preferred_element_type=jnp.float32)
                  + bias_ref[...])


def _bilinear_matrix(in_size, out_size):
    """Interpolation rows matching nn.Upsample(mode='bilinear', align_corners=False)."""
    scale = in_size / out_size
    U = np.zeros((out_size, in_size), dtype=np.float32)
    for o in range(out_size):
        src = (o + 0.5) * scale - 0.5
        src = max(src, 0.0)
        i0 = min(int(np.floor(src)), in_size - 1)
        i1 = min(i0 + 1, in_size - 1)
        l1 = src - i0
        U[o, i0] += 1.0 - l1
        U[o, i1] += l1
    return U


def pixel_unshuffled_downsampling(x, w_dw, b_dw, w_pw, b_pw,
                                  scale_factor=2, kernel_size=3, padding=1):
    N, C, H, W = x.shape
    s = scale_factor
    Hq, Wq = H // (s * s), W // (s * s)     # spatial after unshuffle + maxpool
    KI = s * s                              # input sub-channels per conv group
    K4 = KI * Hq * Wq                       # per-channel linear input dimension
    HW = H * W

    x = x.astype(jnp.float32)

    # ---- host glue: PixelUnshuffle + MaxPool2d(s) (data movement + a tiny max;
    #      only the 2 KiB pooled tensor crosses HBM into the kernel) ---------------
    xu = x.reshape(N, C, H // s, s, W // s, s).transpose(0, 1, 3, 5, 2, 4)
    xu = xu.reshape(N, C * KI, H // s, W // s)
    pooled = xu.reshape(N, C * KI, Hq, s, Wq, s).max(axis=(3, 5))   # (N, C*KI, Hq, Wq)

    # block-diagonal pooled layout: row (c, n), column block c holds (ci, hq, wq)
    pooled_cnk = pooled.reshape(N, C, K4).transpose(1, 0, 2)        # (C, N, K4)
    eye_c = jnp.eye(C, dtype=jnp.float32)
    pooled_bd = (eye_c[:, None, :, None] * pooled_cnk[:, :, None, :]
                 ).reshape(C * N, C * K4)                           # (C*N, C*K4)

    # ---- weight-only precompute: fold grouped conv (zero-pad baked in) + bilinear
    #      upsample into CombStack by pushing a basis through the linear ops --------
    Uh = jnp.asarray(_bilinear_matrix(Hq, H))
    Uw = jnp.asarray(_bilinear_matrix(Wq, W))
    basis = jnp.eye(K4, dtype=jnp.float32).reshape(K4, KI, Hq, Wq)
    dw_basis = lax.conv_general_dilated(
        basis, w_dw.astype(jnp.float32), (1, 1),
        ((padding, padding), (padding, padding)),
        dimension_numbers=('NCHW', 'OIHW', 'NCHW'))                 # (K4, C, Hq, Wq)
    up_basis = jnp.einsum('oh,bchw,pw->bcop', Uh, dw_basis, Uw)     # (K4, C, H, W)
    comb_stack = up_basis.reshape(K4, C, HW).transpose(1, 0, 2).reshape(C * K4, HW)

    # ---- residual input, pointwise weight (kron I_N), folded biases ---------------
    x_cn = x.reshape(N, C, HW).transpose(1, 0, 2).reshape(C * N, HW)
    w_pw2 = w_pw.reshape(C, C).astype(jnp.float32)
    wkron = jnp.kron(w_pw2, jnp.eye(N, dtype=jnp.float32))          # (C*N, C*N)
    bias_col = jnp.repeat(w_pw2 @ b_dw.astype(jnp.float32) + b_pw.astype(jnp.float32),
                          N).reshape(C * N, 1)

    # ---- lane-parallel split of H*W: 2 chunks -> both TensorCores on v7x ----------
    n_chunks = 2 if HW % 256 == 0 else 1
    chunk = HW // n_chunks

    out_cn = pl.pallas_call(
        _hpun_kernel,
        out_shape=jax.ShapeDtypeStruct((C * N, HW), jnp.float32),
        grid=(n_chunks,),
        in_specs=[
            pl.BlockSpec((C * N, C * K4), lambda j: (0, 0)),   # pooled (block-diag)
            pl.BlockSpec((C * K4, chunk), lambda j: (0, j)),   # folded conv+upsample
            pl.BlockSpec((C * N, chunk), lambda j: (0, j)),    # residual x
            pl.BlockSpec((C * N, C * N), lambda j: (0, 0)),    # kron(w_pw, I_N)
            pl.BlockSpec((C * N, 1), lambda j: (0, 0)),        # folded biases
        ],
        out_specs=pl.BlockSpec((C * N, chunk), lambda j: (0, j)),
        compiler_params=pltpu.CompilerParams(dimension_semantics=("parallel",)),
    )(pooled_bd, comb_stack, x_cn, wkron, bias_col)

    return out_cn.reshape(C, N, H, W).transpose(1, 0, 2, 3)


def reference(x, w_dw, b_dw, w_pw, b_pw, scale_factor=2):
    """Plain-JAX reference mirroring the PyTorch module (for validation)."""
    N, C, H, W = x.shape
    s = scale_factor
    xu = x.reshape(N, C, H // s, s, W // s, s).transpose(0, 1, 3, 5, 2, 4)
    xu = xu.reshape(N, C * s * s, H // s, W // s)
    xp = lax.reduce_window(xu, -jnp.inf, lax.max, (1, 1, s, s), (1, 1, s, s), 'VALID')
    dw = lax.conv_general_dilated(xp, w_dw, (1, 1), ((1, 1), (1, 1)),
                                  dimension_numbers=('NCHW', 'OIHW', 'NCHW'),
                                  feature_group_count=C) + b_dw.reshape(1, C, 1, 1)
    Uh = jnp.asarray(_bilinear_matrix(H // (s * s), H))
    Uw = jnp.asarray(_bilinear_matrix(W // (s * s), W))
    up = jnp.einsum('oh,nchw,pw->ncop', Uh, dw, Uw)
    y = up + x
    out = lax.conv_general_dilated(y, w_pw, (1, 1), ((0, 0), (0, 0)),
                                   dimension_numbers=('NCHW', 'OIHW', 'NCHW')) \
        + b_pw.reshape(1, C, 1, 1)
    return out


if __name__ == "__main__":
    N, C, H, W = 2, 4, 16, 16        # in_channels == out_channels == 4, scale_factor = 2
    key = jax.random.PRNGKey(0)
    kx, kw1, kb1, kw2, kb2 = jax.random.split(key, 5)
    x = jax.random.normal(kx, (N, C, H, W), jnp.float32)
    # depthwise (grouped) conv: Conv2d(in=C*4, out=C, groups=C, k=3) -> weight (C, 4, 3, 3)
    w_dw = 0.1 * jax.random.normal(kw1, (C, 4, 3, 3), jnp.float32)
    b_dw = 0.1 * jax.random.normal(kb1, (C,), jnp.float32)
    # pointwise conv: Conv2d(C, C, 1) -> weight (C, C, 1, 1)
    w_pw = 0.1 * jax.random.normal(kw2, (C, C, 1, 1), jnp.float32)
    b_pw = 0.1 * jax.random.normal(kb2, (C,), jnp.float32)

    out = pixel_unshuffled_downsampling(x, w_dw, b_dw, w_pw, b_pw)
    out = jax.block_until_ready(out)

    ref = reference(x, w_dw, b_dw, w_pw, b_pw)
    err = float(jnp.max(jnp.abs(out - ref)))
    assert jnp.allclose(out, ref, rtol=1e-2, atol=1e-2), f"max abs err = {err}"
    print("KERNEL_OK")
</pallas_src>

<mosaic_0001>
module attributes {stable_mosaic.version = 11 : i64} {
  func.func @_hpun_kernel(%arg0: i32, %arg1: memref<8x256xf32, #tpu.memory_space<vmem>>, %arg2: memref<256x128xf32, #tpu.memory_space<vmem>>, %arg3: memref<8x128xf32, #tpu.memory_space<vmem>>, %arg4: memref<8x8xf32, #tpu.memory_space<vmem>>, %arg5: memref<8x1xf32, #tpu.memory_space<vmem>>, %arg6: memref<8x128xf32, #tpu.memory_space<vmem>>) attributes {dimension_semantics = [#tpu.dimension_semantics<parallel>], iteration_bounds = array<i64: 2>, scalar_prefetch = 0 : i64, scratch_operands = 0 : i64, tpu.core_type = #tpu.core_type<tc>, window_params = [{pipeline_mode = #tpu.pipeline_mode<synchronous>, transform_indices = @transform_0, window_bounds = array<i64: 8, 256>}, {transform_indices = @transform_1, window_bounds = array<i64: 256, 128>}, {transform_indices = @transform_2, window_bounds = array<i64: 8, 128>}, {pipeline_mode = #tpu.pipeline_mode<synchronous>, transform_indices = @transform_3, window_bounds = array<i64: 8, 8>}, {pipeline_mode = #tpu.pipeline_mode<synchronous>, transform_indices = @transform_4, window_bounds = array<i64: 8, 1>}, {transform_indices = @transform_5, window_bounds = array<i64: 8, 128>}]} {
    %c0 = arith.constant 0 : index
    %c0_0 = arith.constant 0 : index
    %0 = vector.load %arg1[%c0, %c0_0] : memref<8x256xf32, #tpu.memory_space<vmem>>, vector<8x256xf32>
    %c0_1 = arith.constant 0 : index
    %c0_2 = arith.constant 0 : index
    %1 = vector.load %arg2[%c0_1, %c0_2] : memref<256x128xf32, #tpu.memory_space<vmem>>, vector<256x128xf32>
    %cst = arith.constant dense<0.000000e+00> : vector<8x128xf32>
    %2 = tpu.matmul %0, %1, %cst {dimension_numbers = #tpu.dot_dimension_numbers<[1], [0], [0], [1], [0, 0, 1, 1], [], []>} : vector<8x256xf32>, vector<256x128xf32>, vector<8x128xf32> -> vector<8x128xf32>
    %c0_3 = arith.constant 0 : index
    %c0_4 = arith.constant 0 : index
    %3 = vector.load %arg3[%c0_3, %c0_4] : memref<8x128xf32, #tpu.memory_space<vmem>>, vector<8x128xf32>
    %4 = arith.addf %2, %3 : vector<8x128xf32>
    %c0_5 = arith.constant 0 : index
    %c0_6 = arith.constant 0 : index
    %5 = vector.load %arg4[%c0_5, %c0_6] : memref<8x8xf32, #tpu.memory_space<vmem>>, vector<8x8xf32>
    %cst_7 = arith.constant dense<0.000000e+00> : vector<8x128xf32>
    %6 = tpu.matmul %5, %4, %cst_7 {dimension_numbers = #tpu.dot_dimension_numbers<[1], [0], [0], [1], [0, 0, 1, 1], [], []>} : vector<8x8xf32>, vector<8x128xf32>, vector<8x128xf32> -> vector<8x128xf32>
    %c0_8 = arith.constant 0 : index
    %c0_9 = arith.constant 0 : index
    %7 = vector.load %arg5[%c0_8, %c0_9] : memref<8x1xf32, #tpu.memory_space<vmem>>, vector<8x1xf32>
    %8 = vector.broadcast %7 : vector<8x1xf32> to vector<8x128xf32>
    %9 = arith.addf %6, %8 : vector<8x128xf32>
    %c0_10 = arith.constant 0 : index
    %c0_11 = arith.constant 0 : index
    %10 = vector.load %arg6[%c0_10, %c0_11] : memref<8x128xf32, #tpu.memory_space<vmem>>, vector<8x128xf32>
    tpu.vector_store %arg6[%c0_10, %c0_11], %9 {strides = array<i32>} : memref<8x128xf32, #tpu.memory_space<vmem>>, vector<8x128xf32>,
    return
  }
  func.func @transform_0(%arg0: i32) -> (i32, i32) {
    %c0_i32 = arith.constant 0 : i32
    %c0_i32_0 = arith.constant 0 : i32
    %c0_i32_1 = arith.constant 0 : i32
    return %c0_i32, %c0_i32_0 : i32, i32
  }
  func.func @transform_1(%arg0: i32) -> (i32, i32) {
    %c0_i32 = arith.constant 0 : i32
    %c0_i32_0 = arith.constant 0 : i32
    return %c0_i32, %arg0 : i32, i32
  }
  func.func @transform_2(%arg0: i32) -> (i32, i32) {
    %c0_i32 = arith.constant 0 : i32
    %c0_i32_0 = arith.constant 0 : i32
    return %c0_i32, %arg0 : i32, i32
  }
  func.func @transform_3(%arg0: i32) -> (i32, i32) {
    %c0_i32 = arith.constant 0 : i32
    %c0_i32_0 = arith.constant 0 : i32
    %c0_i32_1 = arith.constant 0 : i32
    return %c0_i32, %c0_i32_0 : i32, i32
  }
  func.func @transform_4(%arg0: i32) -> (i32, i32) {
    %c0_i32 = arith.constant 0 : i32
    %c0_i32_0 = arith.constant 0 : i32
    %c0_i32_1 = arith.constant 0 : i32
    return %c0_i32, %c0_i32_0 : i32, i32
  }
  func.func @transform_5(%arg0: i32) -> (i32, i32) {
    %c0_i32 = arith.constant 0 : i32
    %c0_i32_0 = arith.constant 0 : i32
    return %c0_i32, %arg0 : i32, i32
  }
}

</mosaic_0001>

<llo_original>
// kernel: tpu_custom_call.1
$region0: #{tpu_custom_call.1}
  #allocation0 [shape = 'u32[]', space=smem, size = 0x4, offset = 0x4, fixed_abs, tag = 'smem constant byte address 0x4 - core index']
  #allocation1 [shape = 'u32[144,128]{1,0:T(1,128)}', space=vmem, size = 0x12000, scoped, tag = 'internal scratch']
  %s0 = inlined_call_operand.hbm [shape: f32[8,256], index: 0, kind: input, shape index: {}]
  %s1 = inlined_call_operand.hbm [shape: f32[256,256], index: 1, kind: input, shape index: {}]
  %s2 = inlined_call_operand.vmem [shape: f32[8,256], index: 2, kind: input, shape index: {}]
  %s3 = inlined_call_operand.hbm [shape: f32[8,8], index: 3, kind: input, shape index: {}]
  %s4 = inlined_call_operand.vmem [shape: f32[8,1], index: 4, kind: input, shape index: {}]
  %s5 = inlined_call_operand.hbm [shape: f32[8,256], index: 5, kind: output, shape index: {}]
  %s6 = sld [smem:[#allocation0]]
  $region65: #{tpu_custom_call.1} parent=0
    _
  %s8 = ssub.s32 1, %s6
  %s9 = scalar_select 0, %s8, %s6
  $region1: #{tpu_custom_call.1} parent=0
    #allocation2 [shape = 'u8[8192]{0}', space=vmem, size = 0x2000, scoped, tag = 'input window, operand 0, single buffered']
    #allocation3 [shape = 's32[2]{0}', space=sflag, size = 0x8, scoped, tag = 'scoped memory for tpu_custom_call.1']
    #allocation4 [shape = 's32[2]{0}', space=sflag, size = 0x8, scoped, tag = 'scoped memory for tpu_custom_call.1']
    #allocation5 [shape = 'u8[262144]{0}', space=vmem, size = 0x40000, scoped, tag = 'input window, operand 1']
    #allocation6 [shape = 's32[2]{0}', space=sflag, size = 0x8, scoped, tag = 'scoped memory for tpu_custom_call.1']
    #allocation7 [shape = 'u8[4096]{0}', space=vmem, size = 0x1000, scoped, tag = 'input window, operand 3, single buffered']
    #allocation8 [shape = 'u8[8192]{0}', space=vmem, size = 0x2000, scoped, tag = 'output window, operand 0']
    %10 = vsyncpa [#allocation3], 0
    %11 = vsyncpa [#allocation6], 0
    %s12 = scalar_lea.sflag [#allocation6], 1
    %13 = vsyncpa %s12, 0
    %14 = vsyncpa [#allocation4], 0
    %s15 = scalar_lea.sflag [#allocation4], 1
    %16 = vsyncpa %s15, 0
    loop: start=0, step=1, limit=4
    $region2: #{tpu_custom_call.1} parent=1 // loop_pre_header
      _
    $region3: #{tpu_custom_call.1} parent=1 // loop_header
      %s18 = sphi 0, %s22
      %p19 = scmp.ge.s32.totalorder %s18, 4
      %s26 = sphi 0, %s26
      %s28 = sphi 0, %s26
      %s29 = sphi 0, %s28
      %s43 = sphi 0, %s29
      %s49 = sphi 0, %s51
      %s52 = sphi 0, %s49
      %s53 = sphi 0, %s52
      %s69 = sphi 0, %s53
      %s75 = sphi 0, %s77
      %s78 = sphi 0, %s75
      %s79 = sphi 0, %s78
      %s95 = sphi 0, %s79
      %s99 = sphi 0, %s99
      %s101 = sphi 0, %s99
      %s102 = sphi 0, %s101
      %s116 = sphi 0, %s102
      %s120 = sphi 0, %s120
      %s122 = sphi 0, %s120
      %s123 = sphi 0, %s122
      %s137 = sphi 0, %s123
      %s143 = sphi 0, %s145
      %s146 = sphi 0, %s143
      %s147 = sphi 0, %s146
      %s163 = sphi 0, %s147
    $region4: #{tpu_custom_call.1} parent=1 // loop_header_branch
      %21 = sbr.rel (%p19) target = $region8
    $region5: #{tpu_custom_call.1} parent=1 // loop_body
      %s23 = ssub.s32 %s18, 1
      %s24 = ssub.s32 %s18, 2
      %s25 = sadd.s32 %s18, 1
      %s27 = sadd.s32 %s26, 1
      %p30 = scmp.eq.s32.totalorder %s18, 1
      %p31 = scmp.ne.s32.totalorder %s26, %s28
      %p32 = scmp.eq.s32.totalorder %s18, 0
      %p33 = por %p31, %p32
      %p34 = scmp.ne.s32.totalorder %s26, %s28
      %p35 = scmp.eq.s32.totalorder %s23, 1
      %p36 = por %p34, %p35
      %p37 = scmp.ne.s32.totalorder %s28, %s29
      %p38 = scmp.eq.s32.totalorder %s23, 0
      %p39 = por %p37, %p38
      %p40 = scmp.ne.s32.totalorder %s28, %s29
      %p41 = scmp.eq.s32.totalorder %s24, 1
      %p42 = por %p40, %p41
      %p44 = scmp.ne.s32.totalorder %s29, %s43
      %p45 = scmp.eq.s32.totalorder %s24, 0
      %p46 = por %p44, %p45
      %s47 = ssub.s32 %s18, %s25
      %p48 = scmp.eq.s32.totalorder %s47, 0
      %s50 = sadd.s32 %s49, 1
      %s51 = scalar_select %p48, %s49, %s50
      %p54 = pneg %p48
      %p55 = scmp.eq.s32.totalorder %s18, 1
      %p56 = por %p54, %p55
      %p57 = scmp.ne.s32.totalorder %s49, %s52
      %p58 = scmp.eq.s32.totalorder %s18, 0
      %p59 = por %p57, %p58
      %p60 = scmp.ne.s32.totalorder %s49, %s52
      %p61 = scmp.eq.s32.totalorder %s23, 1
      %p62 = por %p60, %p61
      %p63 = scmp.ne.s32.totalorder %s52, %s53
      %p64 = scmp.eq.s32.totalorder %s23, 0
      %p65 = por %p63, %p64
      %p66 = scmp.ne.s32.totalorder %s52, %s53
      %p67 = scmp.eq.s32.totalorder %s24, 1
      %p68 = por %p66, %p67
      %p70 = scmp.ne.s32.totalorder %s53, %s69
      %p71 = scmp.eq.s32.totalorder %s24, 0
      %p72 = por %p70, %p71
      %s73 = ssub.s32 %s18, %s25
      %p74 = scmp.eq.s32.totalorder %s73, 0
      %s76 = sadd.s32 %s75, 1
      %s77 = scalar_select %p74, %s75, %s76
      %p80 = pneg %p74
      %p81 = scmp.eq.s32.totalorder %s18, 1
      %p82 = por %p80, %p81
      %p83 = scmp.ne.s32.totalorder %s75, %s78
      %p84 = scmp.eq.s32.totalorder %s18, 0
      %p85 = por %p83, %p84
      %p86 = scmp.ne.s32.totalorder %s75, %s78
      %p87 = scmp.eq.s32.totalorder %s23, 1
      %p88 = por %p86, %p87
      %p89 = scmp.ne.s32.totalorder %s78, %s79
      %p90 = scmp.eq.s32.totalorder %s23, 0
      %p91 = por %p89, %p90
      %p92 = scmp.ne.s32.totalorder %s78, %s79
      %p93 = scmp.eq.s32.totalorder %s24, 1
      %p94 = por %p92, %p93
      %p96 = scmp.ne.s32.totalorder %s79, %s95
      %p97 = scmp.eq.s32.totalorder %s24, 0
      %p98 = por %p96, %p97
      %s100 = sadd.s32 %s99, 1
      %p103 = scmp.eq.s32.totalorder %s18, 1
      %p104 = scmp.ne.s32.totalorder %s99, %s101
      %p105 = scmp.eq.s32.totalorder %s18, 0
      %p106 = por %p104, %p105
      %p107 = scmp.ne.s32.totalorder %s99, %s101
      %p108 = scmp.eq.s32.totalorder %s23, 1
      %p109 = por %p107, %p108
      %p110 = scmp.ne.s32.totalorder %s101, %s102
      %p111 = scmp.eq.s32.totalorder %s23, 0
      %p112 = por %p110, %p111
      %p113 = scmp.ne.s32.totalorder %s101, %s102
      %p114 = scmp.eq.s32.totalorder %s24, 1
      %p115 = por %p113, %p114
      %p117 = scmp.ne.s32.totalorder %s102, %s116
      %p118 = scmp.eq.s32.totalorder %s24, 0
      %p119 = por %p117, %p118
      %s121 = sadd.s32 %s120, 1
      %p124 = scmp.eq.s32.totalorder %s18, 1
      %p125 = scmp.ne.s32.totalorder %s120, %s122
      %p126 = scmp.eq.s32.totalorder %s18, 0
      %p127 = por %p125, %p126
      %p128 = scmp.ne.s32.totalorder %s120, %s122
      %p129 = scmp.eq.s32.totalorder %s23, 1
      %p130 = por %p128, %p129
      %p131 = scmp.ne.s32.totalorder %s122, %s123
      %p132 = scmp.eq.s32.totalorder %s23, 0
      %p133 = por %p131, %p132
      %p134 = scmp.ne.s32.totalorder %s122, %s123
      %p135 = scmp.eq.s32.totalorder %s24, 1
      %p136 = por %p134, %p135
      %p138 = scmp.ne.s32.totalorder %s123, %s137
      %p139 = scmp.eq.s32.totalorder %s24, 0
      %p140 = por %p138, %p139
      %s141 = ssub.s32 %s18, %s25
      %p142 = scmp.eq.s32.totalorder %s141, 0
      %s144 = sadd.s32 %s143, 1
      %s145 = scalar_select %p142, %s143, %s144
      %p148 = pneg %p142
      %p149 = scmp.eq.s32.totalorder %s18, 1
      %p150 = por %p148, %p149
      %p151 = scmp.ne.s32.totalorder %s143, %s146
      %p152 = scmp.eq.s32.totalorder %s18, 0
      %p153 = por %p151, %p152
      %p154 = scmp.ne.s32.totalorder %s143, %s146
      %p155 = scmp.eq.s32.totalorder %s23, 1
      %p156 = por %p154, %p155
      %p157 = scmp.ne.s32.totalorder %s146, %s147
      %p158 = scmp.eq.s32.totalorder %s23, 0
      %p159 = por %p157, %p158
      %p160 = scmp.ne.s32.totalorder %s146, %s147
      %p161 = scmp.eq.s32.totalorder %s24, 1
      %p162 = por %p160, %p161
      %p164 = scmp.ne.s32.totalorder %s147, %s163
      %p165 = scmp.eq.s32.totalorder %s24, 0
      %p166 = por %p164, %p165
      %p167 = scmp.le.s32.totalorder 1, %s18
      %p168 = scmp.lt.s32.totalorder %s18, 3
      %p169 = pnand %p167, %p168
      %p170 = pneg %p169
      // Predicated region
      $region9: #{tpu_custom_call.1} parent=5 // pred_check
        _
      $region10: #{tpu_custom_call.1} parent=5 // pred_check_branch
        %172 = sbr.rel (%p169) target = $region12
      $region11: #{tpu_custom_call.1} parent=5 // pred_region
        %s173 = ssub.s32 %s18, 1
        // Predicated region
        $region13: #{tpu_custom_call.1} parent=11 // pred_check
          %p174 = pneg %p39
        $region14: #{tpu_custom_call.1} parent=11 // pred_check_branch
          %176 = sbr.rel (%p174) target = $region16
        $region15: #{tpu_custom_call.1} parent=11 // pred_region
          %s178 = ssub.s32 256, 256
          %179 = vsyncadd [#allocation3], %s178
          %s181 = sshll.u32 [#allocation2], 4
          %s182 = int_to_ptr.vmem [resolvable:$true] %s181
          %184 = dma.hbm_to_vmem [thread:$0]  %s0, 256, %s182, [#allocation3]
        $region16: #{tpu_custom_call.1} parent=11 // pred_fallthru
          _
        // Predicated region
        $region17: #{tpu_custom_call.1} parent=11 // pred_check
          %p185 = pneg %p112
        $region18: #{tpu_custom_call.1} parent=11 // pred_check_branch
          %187 = sbr.rel (%p185) target = $region20
        $region19: #{tpu_custom_call.1} parent=11 // pred_region
          %s189 = ssub.s32 128, 128
          %190 = vsyncadd [#allocation6], %s189
          %s192 = sshll.u32 [#allocation7], 4
          %s193 = int_to_ptr.vmem [resolvable:$true] %s192
          %195 = dma.hbm_to_vmem [thread:$0]  %s3, 128, %s193, [#allocation6]
        $region20: #{tpu_custom_call.1} parent=11 // pred_fallthru
          _
        // Predicated region
        $region21: #{tpu_custom_call.1} parent=11 // pred_check
          %p196 = pneg %p133
        $region22: #{tpu_custom_call.1} parent=11 // pred_check_branch
          %198 = sbr.rel (%p196) target = $region24
        $region23: #{tpu_custom_call.1} parent=11 // pred_region
          _
        $region24: #{tpu_custom_call.1} parent=11 // pred_fallthru
          _
      $region12: #{tpu_custom_call.1} parent=5 // pred_fallthru
        _
      %p199 = scmp.lt.s32.totalorder %s18, 2
      // Predicated region
      $region25: #{tpu_custom_call.1} parent=5 // pred_check
        %p200 = pneg %p199
      $region26: #{tpu_custom_call.1} parent=5 // pred_check_branch
        %202 = sbr.rel (%p200) target = $region28
      $region27: #{tpu_custom_call.1} parent=5 // pred_region
        // Predicated region
        $region29: #{tpu_custom_call.1} parent=27 // pred_check
          %p203 = pneg %p59
        $region30: #{tpu_custom_call.1} parent=27 // pred_check_branch
          %205 = sbr.rel (%p203) target = $region32
        $region31: #{tpu_custom_call.1} parent=27 // pred_region
          %s206 = sand.u32 %s18, 1
          %s207 = scalar_lea.sflag [#allocation6], %s206
          %s208 = sand.u32 %s49, 1
          %s209 = smul.addr %s208, 256
          %s210 = scalar_lea.vmem [#allocation5], %s209
          %s212 = ssub.s32 4096, 4096
          %213 = vsyncadd %s207, %s212
          %s214 = smul.addr %s18, 128
          %s215 = scalar_lea.hbm %s1, %s214
          %s216 = sshll.u32 %s210, 4
          %s217 = int_to_ptr.vmem [resolvable:$true] %s216
          %222 = dma.hbm_to_vmem [thread:$0]  %s215, 4096, %s217, %s207, 256, 128, 8
        $region32: #{tpu_custom_call.1} parent=27 // pred_fallthru
          _
        // Predicated region
        $region33: #{tpu_custom_call.1} parent=27 // pred_check
          %p223 = pneg %p85
        $region34: #{tpu_custom_call.1} parent=27 // pred_check_branch
          %225 = sbr.rel (%p223) target = $region36
        $region35: #{tpu_custom_call.1} parent=27 // pred_region
          %p226 = scmp.lt.s32.totalorder %s18, 1
          %s227 = scalar_select %p226, %s18, 1
          %s228 = smul.addr %s227, 8
          %s229 = scalar_lea.vmem %s2, %s228
        $region36: #{tpu_custom_call.1} parent=27 // pred_fallthru
          _
      $region28: #{tpu_custom_call.1} parent=5 // pred_fallthru
        _
      %p230 = scmp.le.s32.totalorder 1, %s18
      %p231 = scmp.lt.s32.totalorder %s18, 3
      %p232 = pnand %p230, %p231
      %p233 = pneg %p232
      // Predicated region
      $region37: #{tpu_custom_call.1} parent=5 // pred_check
        _
      $region38: #{tpu_custom_call.1} parent=5 // pred_check_branch
        %235 = sbr.rel (%p232) target = $region40
      $region39: #{tpu_custom_call.1} parent=5 // pred_region
        %s236 = ssub.s32 %s18, 1
        // Predicated region
        $region41: #{tpu_custom_call.1} parent=39 // pred_check
          %p237 = pneg %p39
        $region42: #{tpu_custom_call.1} parent=39 // pred_check_branch
          %239 = sbr.rel (%p237) target = $region44
        $region43: #{tpu_custom_call.1} parent=39 // pred_region
          %240 = dma.done [#allocation3], 256
        $region44: #{tpu_custom_call.1} parent=39 // pred_fallthru
          _
        %s241 = sand.u32 %s23, 1
        %s242 = scalar_lea.sflag [#allocation6], %s241
        %s243 = sand.u32 %s52, 1
        %s244 = smul.addr %s243, 256
        %s245 = scalar_lea.vmem [#allocation5], %s244
        // Predicated region
        $region45: #{tpu_custom_call.1} parent=39 // pred_check
          %p246 = pneg %p65
        $region46: #{tpu_custom_call.1} parent=39 // pred_check_branch
          %248 = sbr.rel (%p246) target = $region48
        $region47: #{tpu_custom_call.1} parent=39 // pred_region
          %249 = dma.done %s242, 4096
        $region48: #{tpu_custom_call.1} parent=39 // pred_fallthru
          _
        // Predicated region
        $region49: #{tpu_custom_call.1} parent=39 // pred_check
          %p250 = pneg %p112
        $region50: #{tpu_custom_call.1} parent=39 // pred_check_branch
          %252 = sbr.rel (%p250) target = $region52
        $region51: #{tpu_custom_call.1} parent=39 // pred_region
          %253 = dma.done [#allocation6], 128
        $region52: #{tpu_custom_call.1} parent=39 // pred_fallthru
          _
        %p254 = pneg %p39
        %p255 = pneg %p36
        %s256 = sand.u32 %s23, 1
        %s257 = scalar_lea.sflag [#allocation6], %s256
        %s258 = sand.u32 %s52, 1
        %s259 = smul.addr %s258, 256
        %s260 = scalar_lea.vmem [#allocation5], %s259
        %p261 = pneg %p65
        %p262 = pneg %p62
        %p263 = scmp.lt.s32.totalorder %s23, 1
        %s264 = scalar_select %p263, %s23, 1
        %s265 = smul.addr %s264, 8
        %s266 = scalar_lea.vmem %s2, %s265
        %p267 = pneg %p91
        %p268 = pneg %p88
        %p269 = pneg %p112
        %p270 = pneg %p109
        %p271 = pneg %p133
        %p272 = pneg %p130
        %p273 = pneg %p159
        %p274 = pneg %p156
        %s275 = sand.u32 %s146, 1
        %s276 = scalar_lea.sflag [#allocation4], %s275
        %s277 = sand.u32 %s146, 1
        %s278 = smul.addr %s277, 8
        %s279 = scalar_lea.vmem [#allocation8], %s278
        %p280 = scmp.lt.s32.totalorder %s23, 1
        %s281 = scalar_select %p280, %s23, 1
        %s282 = smul.addr %s281, 8
        %s283 = scalar_lea.vmem %s2, %s282
        %v284 = vld [vmem:[#allocation2] sm:$0xff]
        %v285 = vld [vmem:[#allocation2 + $0x8] sm:$0xff]
        %v286 = vld [vmem:[%s245] sm:$0xff]
        %v287 = vld [vmem:[%s245 + $0x8] sm:$0xff]
        %v288 = vld [vmem:[%s245 + $0x10] sm:$0xff]
        %v289 = vld [vmem:[%s245 + $0x18] sm:$0xff]
        %v290 = vld [vmem:[%s245 + $0x20] sm:$0xff]
        %v291 = vld [vmem:[%s245 + $0x28] sm:$0xff]
        %v292 = vld [vmem:[%s245 + $0x30] sm:$0xff]
        %v293 = vld [vmem:[%s245 + $0x38] sm:$0xff]
        %v294 = vld [vmem:[%s245 + $0x40] sm:$0xff]
        %v295 = vld [vmem:[%s245 + $0x48] sm:$0xff]
        %v296 = vld [vmem:[%s245 + $0x50] sm:$0xff]
        %v297 = vld [vmem:[%s245 + $0x58] sm:$0xff]
        %v298 = vld [vmem:[%s245 + $0x60] sm:$0xff]
        %v299 = vld [vmem:[%s245 + $0x68] sm:$0xff]
        %v300 = vld [vmem:[%s245 + $0x70] sm:$0xff]
        %v301 = vld [vmem:[%s245 + $0x78] sm:$0xff]
        %v302 = vld [vmem:[%s245 + $0x80] sm:$0xff]
        %v303 = vld [vmem:[%s245 + $0x88] sm:$0xff]
        %v304 = vld [vmem:[%s245 + $0x90] sm:$0xff]
        %v305 = vld [vmem:[%s245 + $0x98] sm:$0xff]
        %v306 = vld [vmem:[%s245 + $0xa0] sm:$0xff]
        %v307 = vld [vmem:[%s245 + $0xa8] sm:$0xff]
        %v308 = vld [vmem:[%s245 + $0xb0] sm:$0xff]
        %v309 = vld [vmem:[%s245 + $0xb8] sm:$0xff]
        %v310 = vld [vmem:[%s245 + $0xc0] sm:$0xff]
        %v311 = vld [vmem:[%s245 + $0xc8] sm:$0xff]
        %v312 = vld [vmem:[%s245 + $0xd0] sm:$0xff]
        %v313 = vld [vmem:[%s245 + $0xd8] sm:$0xff]
        %v314 = vld [vmem:[%s245 + $0xe0] sm:$0xff]
        %v315 = vld [vmem:[%s245 + $0xe8] sm:$0xff]
        %v316 = vld [vmem:[%s245 + $0xf0] sm:$0xff]
        %v317 = vld [vmem:[%s245 + $0xf8] sm:$0xff]
        %v318 = vld [vmem:[%s283] sm:$0xff]
        %319 = vmatprep.subr.mxu0 0.0
        %320 = vmatpush1.msra.mxu0 %v286
        %321 = vmatprep.subr.mxu0 0.0
        %322 = vmatpush1.msra.mxu0 %v287
        %323 = vmatprep.subr.mxu0 0.0
        %324 = vmatpush1.msra.mxu0 %v288
        %325 = vmatprep.subr.mxu0 0.0
        %326 = vmatpush1.msra.mxu0 %v289
        %327 = vmatprep.subr.mxu0 0.0
        %328 = vmatpush1.msra.mxu0 %v290
        %329 = vmatprep.subr.mxu0 0.0
        %330 = vmatpush1.msra.mxu0 %v291
        %331 = vmatprep.subr.mxu0 0.0
        %332 = vmatpush1.msra.mxu0 %v292
        %333 = vmatprep.subr.mxu0 0.0
        %334 = vmatpush1.msra.mxu0 %v293
        %335 = vmatprep.subr.mxu0 0.0
        %336 = vmatpush1.msra.mxu0 %v294
        %337 = vmatprep.subr.mxu0 0.0
        %338 = vmatpush1.msra.mxu0 %v295
        %339 = vmatprep.subr.mxu0 0.0
        %340 = vmatpush1.msra.mxu0 %v296
        %341 = vmatprep.subr.mxu0 0.0
        %342 = vmatpush1.msra.mxu0 %v297
        %343 = vmatprep.subr.mxu0 0.0
        %344 = vmatpush1.msra.mxu0 %v298
        %345 = vmatprep.subr.mxu0 0.0
        %346 = vmatpush1.msra.mxu0 %v299
        %347 = vmatprep.subr.mxu0 0.0
        %348 = vmatpush1.msra.mxu0 %v300
        %349 = vmatprep.subr.mxu0 0.0
        %350 = vmatpush1.msra.mxu0 %v301
        %351 = vmatprep.subr.mxu0 0.0
        %352 = vmatpush1.msra.mxu0 %v302
        %353 = vmatprep.subr.mxu0 0.0
        %354 = vmatpush1.msra.mxu0 %v303
        %355 = vmatprep.subr.mxu0 0.0
        %356 = vmatpush1.msra.mxu0 %v304
        %357 = vmatprep.subr.mxu0 0.0
        %358 = vmatpush1.msra.mxu0 %v305
        %359 = vmatprep.subr.mxu0 0.0
        %360 = vmatpush1.msra.mxu0 %v306
        %361 = vmatprep.subr.mxu0 0.0
        %362 = vmatpush1.msra.mxu0 %v307
        %363 = vmatprep.subr.mxu0 0.0
        %364 = vmatpush1.msra.mxu0 %v308
        %365 = vmatprep.subr.mxu0 0.0
        %366 = vmatpush1.msra.mxu0 %v309
        %367 = vmatprep.subr.mxu0 0.0
        %368 = vmatpush1.msra.mxu0 %v310
        %369 = vmatprep.subr.mxu0 0.0
        %370 = vmatpush1.msra.mxu0 %v311
        %371 = vmatprep.subr.mxu0 0.0
        %372 = vmatpush1.msra.mxu0 %v312
        %373 = vmatprep.subr.mxu0 0.0
        %374 = vmatpush1.msra.mxu0 %v313
        %375 = vmatprep.subr.mxu0 0.0
        %376 = vmatpush1.msra.mxu0 %v314
        %377 = vmatprep.subr.mxu0 0.0
        %378 = vmatpush1.msra.mxu0 %v315
        %379 = vmatprep.subr.mxu0 0.0
        %380 = vmatpush1.msra.mxu0 %v316
        %381 = vmatprep.subr.mxu0 0.0
        %382 = vmatpush1.msra.mxu0 %v317
        %383 = vmatprep.mubr.f32.mxu0 %v285
        %384 = vmatmul.mubr.f32.gmra.mrb[0].mxu0 %v284
        %v385 = vpop.f32.mrb[0].mxu0
        %v386 = vadd.f32 %v318, %v385
        %v387 = vpop.f32.mrb[0].mxu0
        %388 = vdwg.mxu0
        %v389 = vld [vmem:[#allocation7] sm:$0xff]
        %v390 = vld [vmem:[%s4] sm:$0xff]
        %392 = vset.pattern.permute.xlu0 0
        %393 = vperm.xlu0 %392, %v390
        %v394 = vpop.permute.xlu0 %393
        %vm396 = vcmask 64512
        %v398 = vsel %vm396, %v389, 0
        %400 = vmatprep.subr.mxu0 0.0
        %401 = vmatpush1.msra.mxu0 %v386
        %402 = vmatprep.subr.mxu0 0.0
        %403 = vmatpush1.msra.mxu0 0.0
        %404 = vmatprep.subr.mxu0 0.0
        %405 = vmatpush1.msra.mxu0 0.0
        %406 = vmatprep.subr.mxu0 0.0
        %407 = vmatpush1.msra.mxu0 0.0
        %408 = vmatprep.subr.mxu0 0.0
        %409 = vmatpush1.msra.mxu0 0.0
        %410 = vmatprep.subr.mxu0 0.0
        %411 = vmatpush1.msra.mxu0 0.0
        %412 = vmatprep.subr.mxu0 0.0
        %413 = vmatpush1.msra.mxu0 0.0
        %414 = vmatprep.subr.mxu0 0.0
        %415 = vmatpush1.msra.mxu0 0.0
        %416 = vmatprep.subr.mxu0 0.0
        %417 = vmatpush1.msra.mxu0 0.0
        %418 = vmatprep.subr.mxu0 0.0
        %419 = vmatpush1.msra.mxu0 0.0
        %420 = vmatprep.subr.mxu0 0.0
        %421 = vmatpush1.msra.mxu0 0.0
        %422 = vmatprep.subr.mxu0 0.0
        %423 = vmatpush1.msra.mxu0 0.0
        %424 = vmatprep.subr.mxu0 0.0
        %425 = vmatpush1.msra.mxu0 0.0
        %426 = vmatprep.subr.mxu0 0.0
        %427 = vmatpush1.msra.mxu0 0.0
        %428 = vmatprep.subr.mxu0 0.0
        %429 = vmatpush1.msra.mxu0 0.0
        %430 = vmatprep.subr.mxu0 0.0
        %431 = vmatpush1.msra.mxu0 0.0
        %432 = vmatprep.subr.mxu0 0.0
        %433 = vmatpush1.msra.mxu0 0.0
        %434 = vmatprep.subr.mxu0 0.0
        %435 = vmatpush1.msra.mxu0 0.0
        %436 = vmatprep.subr.mxu0 0.0
        %437 = vmatpush1.msra.mxu0 0.0
        %438 = vmatprep.subr.mxu0 0.0
        %439 = vmatpush1.msra.mxu0 0.0
        %440 = vmatprep.subr.mxu0 0.0
        %441 = vmatpush1.msra.mxu0 0.0
        %442 = vmatprep.subr.mxu0 0.0
        %443 = vmatpush1.msra.mxu0 0.0
        %444 = vmatprep.subr.mxu0 0.0
        %445 = vmatpush1.msra.mxu0 0.0
        %446 = vmatprep.subr.mxu0 0.0
        %447 = vmatpush1.msra.mxu0 0.0
        %448 = vmatprep.subr.mxu0 0.0
        %449 = vmatpush1.msra.mxu0 0.0
        %450 = vmatprep.subr.mxu0 0.0
        %451 = vmatpush1.msra.mxu0 0.0
        %452 = vmatprep.subr.mxu0 0.0
        %453 = vmatpush1.msra.mxu0 0.0
        %454 = vmatprep.subr.mxu0 0.0
        %455 = vmatpush1.msra.mxu0 0.0
        %456 = vmatprep.subr.mxu0 0.0
        %457 = vmatpush1.msra.mxu0 0.0
        %458 = vmatprep.subr.mxu0 0.0
        %459 = vmatpush1.msra.mxu0 0.0
        %460 = vmatprep.subr.mxu0 0.0
        %461 = vmatpush1.msra.mxu0 0.0
        %462 = vmatprep.subr.mxu0 0.0
        %463 = vmatpush1.msra.mxu0 0.0
        %464 = vmatprep.mubr.f32.mxu0 0.0
        %465 = vmatmul.mubr.f32.gmra.mrb[0].mxu0 %v398
        %v466 = vpop.f32.mrb[0].mxu0
        %v467 = vadd.f32 %v394, %v466
        %v468 = vpop.f32.mrb[0].mxu0
        %469 = vdwg.mxu0
        %470 = vst [vmem:[%s279] sm:$0xff] %v467
        %s471 = sand.u32 %s146, 1
        %s472 = scalar_lea.sflag [#allocation4], %s471
        %s473 = sand.u32 %s146, 1
        %s474 = smul.addr %s473, 8
        %s475 = scalar_lea.vmem [#allocation8], %s474
        // Predicated region
        $region53: #{tpu_custom_call.1} parent=39 // pred_check
          %p476 = pneg %p156
        $region54: #{tpu_custom_call.1} parent=39 // pred_check_branch
          %478 = sbr.rel (%p476) target = $region56
        $region55: #{tpu_custom_call.1} parent=39 // pred_region
          %s480 = ssub.s32 128, 128
          %481 = vsyncadd %s472, %s480
          %s482 = smul.addr %s23, 128
          %s483 = scalar_lea.hbm %s5, %s482
          %s485 = sshll.u32 %s475, 4
          %s486 = int_to_ptr.vmem [resolvable:$true] %s485
          %488 = dma.vmem_to_hbm [thread:$0]  %s486, 128, %s483, %s472
        $region56: #{tpu_custom_call.1} parent=39 // pred_fallthru
          _
      $region40: #{tpu_custom_call.1} parent=5 // pred_fallthru
        _
      %p489 = scmp.le.s32.totalorder 2, %s18
      // Predicated region
      $region57: #{tpu_custom_call.1} parent=5 // pred_check
        %p490 = pneg %p489
      $region58: #{tpu_custom_call.1} parent=5 // pred_check_branch
        %492 = sbr.rel (%p490) target = $region60
      $region59: #{tpu_custom_call.1} parent=5 // pred_region
        %s493 = ssub.s32 %s18, 2
        // Predicated region
        $region61: #{tpu_custom_call.1} parent=59 // pred_check
          %p494 = pneg %p162
        $region62: #{tpu_custom_call.1} parent=59 // pred_check_branch
          %496 = sbr.rel (%p494) target = $region64
        $region63: #{tpu_custom_call.1} parent=59 // pred_region
          %s497 = sand.u32 %s147, 1
          %s498 = scalar_lea.sflag [#allocation4], %s497
          %s499 = sand.u32 %s147, 1
          %s500 = smul.addr %s499, 8
          %s501 = scalar_lea.vmem [#allocation8], %s500
          %502 = dma.done %s498, 128
        $region64: #{tpu_custom_call.1} parent=59 // pred_fallthru
          _
      $region60: #{tpu_custom_call.1} parent=5 // pred_fallthru
        _
    $region6: #{tpu_custom_call.1} parent=1 // loop_footer
      %s22 = sadd.s32 1, %s18
    $region7: #{tpu_custom_call.1} parent=1 // loop_footer_branch
      %17 = sbr.rel target = $region3
    $region8: #{tpu_custom_call.1} parent=1 // loop_exit
      _
    %503 = vsyncpa [#allocation3], 1
    %s504 = scalar_lea.sflag [#allocation3], 1
    %505 = vsyncpa %s504, 1
    %506 = vsyncpa [#allocation6], 1
    %s507 = scalar_lea.sflag [#allocation6], 1
    %508 = vsyncpa %s507, 1
    %509 = vsyncpa [#allocation4], 1
    %s510 = scalar_lea.sflag [#allocation4], 1
    %511 = vsyncpa %s510, 1

</llo_original>
